<compile_context>
chip_gen: v7x
topology: tpu7x:2x2x1
jax: 0.10.0
libtpu: 0.0.40
codegen_flags: <defaults>
</compile_context>

<pallas_src>
import functools

import jax
import jax.numpy as jnp
from jax.experimental import pallas as pl
from jax.experimental.pallas import tpu as pltpu


# ---------------------------------------------------------------------------
# Kernels
# ---------------------------------------------------------------------------
def _film_kernel(film_ref, tbf_ref, wfc_ref, bfc_ref, wo_ref, bo_ref, o_ref, *, dim):
    # One fused (K=input_dim, N=2*dim) matmul produces [gamma || beta].
    h = jnp.dot(film_ref[...], wfc_ref[...], preferred_element_type=jnp.float32)
    h = h + bfc_ref[...].astype(jnp.float32)          # bias kept f32 (v5e-safe)

    # Lane-dim split; `dim` is a multiple of 128 in practice so the slices are
    # lane-tile aligned (no cross-tile copies).
    gamma = h[:, :dim]
    beta = h[:, dim:]

    mod = gamma * tbf_ref[...].astype(jnp.float32) + beta   # FiLM modulation in f32

    out = jnp.dot(mod.astype(wo_ref.dtype), wo_ref[...],
                  preferred_element_type=jnp.float32)
    out = out + bo_ref[...].astype(jnp.float32)
    o_ref[...] = out.astype(o_ref.dtype)


def _linear_kernel(x_ref, w_ref, b_ref, o_ref):
    acc = jnp.dot(x_ref[...], w_ref[...], preferred_element_type=jnp.float32)
    acc = acc + b_ref[...].astype(jnp.float32)
    o_ref[...] = acc.astype(o_ref.dtype)


# ---------------------------------------------------------------------------
# Parameters (PyTorch-default Linear init), pre-transposed ONCE at init so the
# per-call path never pays an HBM transpose/copy of the weights.
# ---------------------------------------------------------------------------
def init_film_params(key, input_dim=512, dim=512, output_dim=100,
                     compute_dtype=jnp.float32):
    k1, k2, k3, k4 = jax.random.split(key, 4)
    bound_fc = 1.0 / (input_dim ** 0.5)
    w_fc = jax.random.uniform(k1, (2 * dim, input_dim), minval=-bound_fc,
                              maxval=bound_fc, dtype=jnp.float32)
    b_fc = jax.random.uniform(k2, (2 * dim,), minval=-bound_fc,
                              maxval=bound_fc, dtype=jnp.float32)
    bound_out = 1.0 / (dim ** 0.5)
    w_out = jax.random.uniform(k3, (output_dim, dim), minval=-bound_out,
                               maxval=bound_out, dtype=jnp.float32)
    b_out = jax.random.uniform(k4, (output_dim,), minval=-bound_out,
                               maxval=bound_out, dtype=jnp.float32)
    return {
        # kernel-layout (pre-transposed, optionally bf16) params
        "wfc_t": w_fc.T.astype(compute_dtype),    # (input_dim, 2*dim)
        "bfc": b_fc.reshape(1, 2 * dim),          # f32, lane-aligned broadcast
        "wo_t": w_out.T.astype(compute_dtype),    # (dim, output_dim)
        "bo": b_out.reshape(1, output_dim),       # f32
        # raw f32 weights kept only for the pure-JAX reference in __main__
        "w_fc": w_fc, "b_fc": b_fc, "w_out": w_out, "b_out": b_out,
        "dim": dim,
    }


# ---------------------------------------------------------------------------
# Forward
# ---------------------------------------------------------------------------
def _pick_tiles(B, O):
    # Full block if small; otherwise 256-row / 512-lane tiles (multiples of the
    # (8,128) layout and big enough to be DMA/MXU efficient).
    tm = B if (B <= 256 or B % 256 != 0) else 256
    tn = O if (O <= 512 or O % 512 != 0) else 512
    return tm, tn


def _mosaic_params():
    return pltpu.CompilerParams(dimension_semantics=("parallel", "parallel"))


def _linear(w_t, b2d, x, out_dtype):
    B, K = x.shape
    O = w_t.shape[1]
    tm, tn = _pick_tiles(B, O)
    return pl.pallas_call(
        _linear_kernel,
        out_shape=jax.ShapeDtypeStruct((B, O), out_dtype),
        grid_spec=pltpu.PrefetchScalarGridSpec(
            num_scalar_prefetch=0,
            grid=(B // tm, O // tn),
            in_specs=[
                pl.BlockSpec((tm, K), lambda i, j: (i, 0)),
                pl.BlockSpec((K, tn), lambda i, j: (0, j)),
                pl.BlockSpec((1, tn), lambda i, j: (0, j)),
            ],
            out_specs=pl.BlockSpec((tm, tn), lambda i, j: (i, j)),
        ),
        compiler_params=_mosaic_params(),
    )(x, w_t, b2d)


def film_forward(params, x, y, mode=0, x_film=True, out_dtype=None):
    """Matches FiLM.forward(x, y, mode) from the PyTorch module."""
    if out_dtype is None:
        out_dtype = x.dtype
    compute_dtype = params["wfc_t"].dtype
    dim = params["dim"]

    if mode != 0:
        x_out = _linear(params["wo_t"], params["bo"], x.astype(compute_dtype), out_dtype)
        y_out = _linear(params["wo_t"], params["bo"], y.astype(compute_dtype), out_dtype)
        return x_out, y_out

    film, tbf = (x, y) if x_film else (y, x)
    film = film.astype(compute_dtype)
    tbf = tbf.astype(compute_dtype)

    B, input_dim = film.shape
    assert tbf.shape == (B, dim), "to_be_film must have feature dim == dim"
    O = params["wo_t"].shape[1]
    tm, tn = _pick_tiles(B, O)

    kernel = functools.partial(_film_kernel, dim=dim)
    return pl.pallas_call(
        kernel,
        out_shape=jax.ShapeDtypeStruct((B, O), out_dtype),
        grid_spec=pltpu.PrefetchScalarGridSpec(
            num_scalar_prefetch=0,
            grid=(B // tm, O // tn),
            in_specs=[
                pl.BlockSpec((tm, input_dim), lambda i, j: (i, 0)),   # film
                pl.BlockSpec((tm, dim), lambda i, j: (i, 0)),         # to_be_film
                pl.BlockSpec((input_dim, 2 * dim), lambda i, j: (0, 0)),  # W_fc^T
                pl.BlockSpec((1, 2 * dim), lambda i, j: (0, 0)),          # b_fc
                pl.BlockSpec((dim, tn), lambda i, j: (0, j)),             # W_out^T
                pl.BlockSpec((1, tn), lambda i, j: (0, j)),               # b_out
            ],
            out_specs=pl.BlockSpec((tm, tn), lambda i, j: (i, j)),
        ),
        compiler_params=_mosaic_params(),
    )(film, tbf, params["wfc_t"], params["bfc"], params["wo_t"], params["bo"])


# ---------------------------------------------------------------------------
# Demo / correctness check
# ---------------------------------------------------------------------------
if __name__ == "__main__":
    B, input_dim, dim, output_dim = 8, 128, 128, 128

    key = jax.random.PRNGKey(0)
    kp, kx, ky = jax.random.split(key, 3)

    x = jax.random.normal(kx, (B, input_dim), dtype=jnp.float32)
    y = jax.random.normal(ky, (B, dim), dtype=jnp.float32)

    # --- f32 params: exact check against the PyTorch math ---
    params = init_film_params(kp, input_dim, dim, output_dim,
                              compute_dtype=jnp.float32)
    out = jax.block_until_ready(film_forward(params, x, y))

    h = x @ params["w_fc"].T + params["b_fc"]
    gamma, beta = h[:, :dim], h[:, dim:]
    ref = (gamma * y + beta) @ params["w_out"].T + params["b_out"]
    assert out.shape == (B, output_dim)
    assert jnp.allclose(out, ref, atol=1e-4, rtol=1e-4), "f32 mismatch vs reference"

    # --- bf16 weights/activations, f32 accumulation (v6e/v7x MXU path) ---
    params_bf16 = init_film_params(kp, input_dim, dim, output_dim,
                                   compute_dtype=jnp.bfloat16)
    out_bf16 = jax.block_until_ready(
        film_forward(params_bf16, x, y, out_dtype=jnp.float32))
    assert jnp.allclose(out_bf16, ref, atol=5e-2, rtol=5e-2), "bf16 mismatch vs reference"

    # --- mode=1 path: fc_out applied to x and y independently ---
    x1 = jax.random.normal(kx, (B, dim), dtype=jnp.float32)
    y1 = jax.random.normal(ky, (B, dim), dtype=jnp.float32)
    xo, yo = film_forward(params, x1, y1, mode=1)
    xo, yo = jax.block_until_ready((xo, yo))
    assert jnp.allclose(xo, x1 @ params["w_out"].T + params["b_out"],
                        atol=1e-4, rtol=1e-4), "mode=1 x mismatch"
    assert jnp.allclose(yo, y1 @ params["w_out"].T + params["b_out"],
                        atol=1e-4, rtol=1e-4), "mode=1 y mismatch"

    print("KERNEL_OK")
</pallas_src>

<mosaic_0001>
module attributes {stable_mosaic.version = 11 : i64} {
  func.func @_film_kernel(%arg0: i32, %arg1: i32, %arg2: memref<8x128xf32, #tpu.memory_space<vmem>>, %arg3: memref<8x128xf32, #tpu.memory_space<vmem>>, %arg4: memref<128x256xf32, #tpu.memory_space<vmem>>, %arg5: memref<1x256xf32, #tpu.memory_space<vmem>>, %arg6: memref<128x128xf32, #tpu.memory_space<vmem>>, %arg7: memref<1x128xf32, #tpu.memory_space<vmem>>, %arg8: memref<8x128xf32, #tpu.memory_space<vmem>>) attributes {dimension_semantics = [#tpu.dimension_semantics<parallel>, #tpu.dimension_semantics<parallel>], iteration_bounds = array<i64: 1, 1>, scalar_prefetch = 0 : i64, scratch_operands = 0 : i64, tpu.core_type = #tpu.core_type<tc>, window_params = [{transform_indices = @transform_0, window_bounds = array<i64: 8, 128>}, {transform_indices = @transform_1, window_bounds = array<i64: 8, 128>}, {pipeline_mode = #tpu.pipeline_mode<synchronous>, transform_indices = @transform_2, window_bounds = array<i64: 128, 256>}, {pipeline_mode = #tpu.pipeline_mode<synchronous>, transform_indices = @transform_3, window_bounds = array<i64: 1, 256>}, {transform_indices = @transform_4, window_bounds = array<i64: 128, 128>}, {transform_indices = @transform_5, window_bounds = array<i64: 1, 128>}, {transform_indices = @transform_6, window_bounds = array<i64: 8, 128>}]} {
    %c0 = arith.constant 0 : index
    %c0_0 = arith.constant 0 : index
    %0 = vector.load %arg2[%c0, %c0_0] : memref<8x128xf32, #tpu.memory_space<vmem>>, vector<8x128xf32>
    %c0_1 = arith.constant 0 : index
    %c0_2 = arith.constant 0 : index
    %1 = vector.load %arg4[%c0_1, %c0_2] : memref<128x256xf32, #tpu.memory_space<vmem>>, vector<128x256xf32>
    %cst = arith.constant dense<0.000000e+00> : vector<8x256xf32>
    %2 = tpu.matmul %0, %1, %cst {dimension_numbers = #tpu.dot_dimension_numbers<[1], [0], [0], [1], [0, 0, 1, 1], [], []>} : vector<8x128xf32>, vector<128x256xf32>, vector<8x256xf32> -> vector<8x256xf32>
    %c0_3 = arith.constant 0 : index
    %c0_4 = arith.constant 0 : index
    %3 = vector.load %arg5[%c0_3, %c0_4] : memref<1x256xf32, #tpu.memory_space<vmem>>, vector<1x256xf32>
    %4 = vector.broadcast %3 : vector<1x256xf32> to vector<8x256xf32>
    %5 = arith.addf %2, %4 : vector<8x256xf32>
    %6 = vector.extract_strided_slice %5 {offsets = [0, 0], sizes = [8, 128], strides = [1, 1]} : vector<8x256xf32> to vector<8x128xf32>
    %7 = vector.extract_strided_slice %5 {offsets = [0, 128], sizes = [8, 128], strides = [1, 1]} : vector<8x256xf32> to vector<8x128xf32>
    %c0_5 = arith.constant 0 : index
    %c0_6 = arith.constant 0 : index
    %8 = vector.load %arg3[%c0_5, %c0_6] : memref<8x128xf32, #tpu.memory_space<vmem>>, vector<8x128xf32>
    %9 = arith.mulf %6, %8 : vector<8x128xf32>
    %10 = arith.addf %9, %7 : vector<8x128xf32>
    %c0_7 = arith.constant 0 : index
    %c0_8 = arith.constant 0 : index
    %11 = vector.load %arg6[%c0_7, %c0_8] : memref<128x128xf32, #tpu.memory_space<vmem>>, vector<128x128xf32>
    %cst_9 = arith.constant dense<0.000000e+00> : vector<8x128xf32>
    %12 = tpu.matmul %10, %11, %cst_9 {dimension_numbers = #tpu.dot_dimension_numbers<[1], [0], [0], [1], [0, 0, 1, 1], [], []>} : vector<8x128xf32>, vector<128x128xf32>, vector<8x128xf32> -> vector<8x128xf32>
    %c0_10 = arith.constant 0 : index
    %c0_11 = arith.constant 0 : index
    %13 = vector.load %arg7[%c0_10, %c0_11] : memref<1x128xf32, #tpu.memory_space<vmem>>, vector<1x128xf32>
    %14 = vector.broadcast %13 : vector<1x128xf32> to vector<8x128xf32>
    %15 = arith.addf %12, %14 : vector<8x128xf32>
    %c0_12 = arith.constant 0 : index
    %c0_13 = arith.constant 0 : index
    %16 = vector.load %arg8[%c0_12, %c0_13] : memref<8x128xf32, #tpu.memory_space<vmem>>, vector<8x128xf32>
    tpu.vector_store %arg8[%c0_12, %c0_13], %15 {strides = array<i32>} : memref<8x128xf32, #tpu.memory_space<vmem>>, vector<8x128xf32>,
    return
  }
  func.func @transform_0(%arg0: i32, %arg1: i32) -> (i32, i32) {
    %c0_i32 = arith.constant 0 : i32
    %c0_i32_0 = arith.constant 0 : i32
    return %arg0, %c0_i32 : i32, i32
  }
  func.func @transform_1(%arg0: i32, %arg1: i32) -> (i32, i32) {
    %c0_i32 = arith.constant 0 : i32
    %c0_i32_0 = arith.constant 0 : i32
    return %arg0, %c0_i32 : i32, i32
  }
  func.func @transform_2(%arg0: i32, %arg1: i32) -> (i32, i32) {
    %c0_i32 = arith.constant 0 : i32
    %c0_i32_0 = arith.constant 0 : i32
    %c0_i32_1 = arith.constant 0 : i32
    return %c0_i32, %c0_i32_0 : i32, i32
  }
  func.func @transform_3(%arg0: i32, %arg1: i32) -> (i32, i32) {
    %c0_i32 = arith.constant 0 : i32
    %c0_i32_0 = arith.constant 0 : i32
    %c0_i32_1 = arith.constant 0 : i32
    return %c0_i32, %c0_i32_0 : i32, i32
  }
  func.func @transform_4(%arg0: i32, %arg1: i32) -> (i32, i32) {
    %c0_i32 = arith.constant 0 : i32
    %c0_i32_0 = arith.constant 0 : i32
    return %c0_i32, %arg1 : i32, i32
  }
  func.func @transform_5(%arg0: i32, %arg1: i32) -> (i32, i32) {
    %c0_i32 = arith.constant 0 : i32
    %c0_i32_0 = arith.constant 0 : i32
    return %c0_i32, %arg1 : i32, i32
  }
  func.func @transform_6(%arg0: i32, %arg1: i32) -> (i32, i32) {
    %c0_i32 = arith.constant 0 : i32
    return %arg0, %arg1 : i32, i32
  }
}

</mosaic_0001>

<llo_original>
// kernel: tpu_custom_call.1
$region0: #{tpu_custom_call.1}
  #allocation0 [shape = 'u32[]', space=smem, size = 0x4, offset = 0x4, fixed_abs, tag = 'smem constant byte address 0x4 - core index']
  #allocation1 [shape = 'u32[144,128]{1,0:T(1,128)}', space=vmem, size = 0x12000, scoped, tag = 'internal scratch']
  %s0 = inlined_call_operand.hbm [shape: f32[8,128], index: 0, kind: input, shape index: {}]
  %s1 = inlined_call_operand.hbm [shape: f32[8,128], index: 1, kind: input, shape index: {}]
  %s2 = inlined_call_operand.hbm [shape: f32[128,256], index: 2, kind: input, shape index: {}]
  %s3 = inlined_call_operand.vmem [shape: f32[1,256], index: 3, kind: input, shape index: {}]
  %s4 = inlined_call_operand.hbm [shape: f32[128,128], index: 4, kind: input, shape index: {}]
  %s5 = inlined_call_operand.vmem [shape: f32[1,128], index: 5, kind: input, shape index: {}]
  %s6 = inlined_call_operand.hbm [shape: f32[8,128], index: 6, kind: output, shape index: {}]
  %s7 = sld [smem:[#allocation0]]
  $region50: #{tpu_custom_call.1} parent=0
    _
  %s9 = ssub.s32 1, %s7
  %s10 = scalar_select 0, %s9, %s7
  $region1: #{tpu_custom_call.1} parent=0
    #allocation2 [shape = 'u8[4096]{0}', space=vmem, size = 0x1000, scoped, tag = 'input window, operand 0, single buffered']
    #allocation3 [shape = 's32[1]{0}', space=sflag, size = 0x4, scoped, tag = 'scoped memory for tpu_custom_call.1']
    #allocation4 [shape = 's32[1]{0}', space=sflag, size = 0x4, scoped, tag = 'scoped memory for tpu_custom_call.1']
    #allocation5 [shape = 'u8[4096]{0}', space=vmem, size = 0x1000, scoped, tag = 'input window, operand 1, single buffered']
    #allocation6 [shape = 's32[1]{0}', space=sflag, size = 0x4, scoped, tag = 'scoped memory for tpu_custom_call.1']
    #allocation7 [shape = 'u8[131072]{0}', space=vmem, size = 0x20000, scoped, tag = 'input window, operand 2, single buffered']
    #allocation8 [shape = 'u8[65536]{0}', space=vmem, size = 0x10000, scoped, tag = 'input window, operand 4, single buffered']
    #allocation9 [shape = 's32[1]{0}', space=sflag, size = 0x4, scoped, tag = 'scoped memory for tpu_custom_call.1']
    #allocation10 [shape = 'u8[4096]{0}', space=vmem, size = 0x1000, scoped, tag = 'output window, operand 0, single buffered']
    %11 = vsyncpa [#allocation3], 0
    %12 = vsyncpa [#allocation6], 0
    %13 = vsyncpa [#allocation9], 0
    %14 = vsyncpa [#allocation4], 0
    // Predicated region
    $region2: #{tpu_custom_call.1} parent=1 // pred_check
      _
    $region3: #{tpu_custom_call.1} parent=1 // pred_check_branch
      %16 = sbr.rel (0) target = $region5
    $region4: #{tpu_custom_call.1} parent=1 // pred_region
      %s18 = ssub.s32 128, 128
      %19 = vsyncadd [#allocation3], %s18
      %s21 = sshll.u32 [#allocation2], 4
      %s22 = int_to_ptr.vmem [resolvable:$true] %s21
      %24 = dma.hbm_to_vmem [thread:$0]  %s0, 128, %s22, [#allocation3]
    $region5: #{tpu_custom_call.1} parent=1 // pred_fallthru
      _
    // Predicated region
    $region6: #{tpu_custom_call.1} parent=1 // pred_check
      _
    $region7: #{tpu_custom_call.1} parent=1 // pred_check_branch
      %26 = sbr.rel (0) target = $region9
    $region8: #{tpu_custom_call.1} parent=1 // pred_region
      %s28 = ssub.s32 128, 128
      %29 = vsyncadd [#allocation6], %s28
      %s31 = sshll.u32 [#allocation5], 4
      %s32 = int_to_ptr.vmem [resolvable:$true] %s31
      %34 = dma.hbm_to_vmem [thread:$0]  %s1, 128, %s32, [#allocation6]
    $region9: #{tpu_custom_call.1} parent=1 // pred_fallthru
      _
    // Predicated region
    $region10: #{tpu_custom_call.1} parent=1 // pred_check
      _
    $region11: #{tpu_custom_call.1} parent=1 // pred_check_branch
      %36 = sbr.rel (0) target = $region13
    $region12: #{tpu_custom_call.1} parent=1 // pred_region
      %s38 = ssub.s32 4096, 4096
      %39 = vsyncadd [#allocation6], %s38
      %s40 = sshll.u32 [#allocation7], 4
      %s41 = int_to_ptr.vmem [resolvable:$true] %s40
      %46 = dma.hbm_to_vmem [thread:$0]  %s2, 4096, %s41, [#allocation6], 256, 256, 16
    $region13: #{tpu_custom_call.1} parent=1 // pred_fallthru
      _
    // Predicated region
    $region14: #{tpu_custom_call.1} parent=1 // pred_check
      _
    $region15: #{tpu_custom_call.1} parent=1 // pred_check_branch
      %48 = sbr.rel (0) target = $region17
    $region16: #{tpu_custom_call.1} parent=1 // pred_region
      _
    $region17: #{tpu_custom_call.1} parent=1 // pred_fallthru
      _
    // Predicated region
    $region18: #{tpu_custom_call.1} parent=1 // pred_check
      _
    $region19: #{tpu_custom_call.1} parent=1 // pred_check_branch
      %50 = sbr.rel (0) target = $region21
    $region20: #{tpu_custom_call.1} parent=1 // pred_region
      %s52 = ssub.s32 2048, 2048
      %53 = vsyncadd [#allocation9], %s52
      %s54 = sshll.u32 [#allocation8], 4
      %s55 = int_to_ptr.vmem [resolvable:$true] %s54
      %60 = dma.hbm_to_vmem [thread:$0]  %s4, 2048, %s55, [#allocation9], 128, 128, 8
    $region21: #{tpu_custom_call.1} parent=1 // pred_fallthru
      _
    // Predicated region
    $region22: #{tpu_custom_call.1} parent=1 // pred_check
      _
    $region23: #{tpu_custom_call.1} parent=1 // pred_check_branch
      %62 = sbr.rel (0) target = $region25
    $region24: #{tpu_custom_call.1} parent=1 // pred_region
      _
    $region25: #{tpu_custom_call.1} parent=1 // pred_fallthru
      _
    // Predicated region
    $region26: #{tpu_custom_call.1} parent=1 // pred_check
      _
    $region27: #{tpu_custom_call.1} parent=1 // pred_check_branch
      %64 = sbr.rel (0) target = $region29
    $region28: #{tpu_custom_call.1} parent=1 // pred_region
      %65 = dma.done [#allocation3], 128
    $region29: #{tpu_custom_call.1} parent=1 // pred_fallthru
      _
    // Predicated region
    $region30: #{tpu_custom_call.1} parent=1 // pred_check
      _
    $region31: #{tpu_custom_call.1} parent=1 // pred_check_branch
      %67 = sbr.rel (0) target = $region33
    $region32: #{tpu_custom_call.1} parent=1 // pred_region
      %68 = dma.done [#allocation6], 128
    $region33: #{tpu_custom_call.1} parent=1 // pred_fallthru
      _
    // Predicated region
    $region34: #{tpu_custom_call.1} parent=1 // pred_check
      _
    $region35: #{tpu_custom_call.1} parent=1 // pred_check_branch
      %70 = sbr.rel (0) target = $region37
    $region36: #{tpu_custom_call.1} parent=1 // pred_region
      %71 = dma.done [#allocation6], 4096
    $region37: #{tpu_custom_call.1} parent=1 // pred_fallthru
      _
    // Predicated region
    $region38: #{tpu_custom_call.1} parent=1 // pred_check
      _
    $region39: #{tpu_custom_call.1} parent=1 // pred_check_branch
      %73 = sbr.rel (0) target = $region41
    $region40: #{tpu_custom_call.1} parent=1 // pred_region
      %74 = dma.done [#allocation9], 2048
    $region41: #{tpu_custom_call.1} parent=1 // pred_fallthru
      _
    %v75 = vld [vmem:[#allocation2] sm:$0xff]
    %v76 = vld [vmem:[#allocation7] sm:$0xff]
    %v77 = vld [vmem:[#allocation7 + $0x8] sm:$0xff]
    %v78 = vld [vmem:[#allocation7 + $0x10] sm:$0xff]
    %v79 = vld [vmem:[#allocation7 + $0x18] sm:$0xff]
    %v80 = vld [vmem:[#allocation7 + $0x20] sm:$0xff]
    %v81 = vld [vmem:[#allocation7 + $0x28] sm:$0xff]
    %v82 = vld [vmem:[#allocation7 + $0x30] sm:$0xff]
    %v83 = vld [vmem:[#allocation7 + $0x38] sm:$0xff]
    %v84 = vld [vmem:[#allocation7 + $0x40] sm:$0xff]
    %v85 = vld [vmem:[#allocation7 + $0x48] sm:$0xff]
    %v86 = vld [vmem:[#allocation7 + $0x50] sm:$0xff]
    %v87 = vld [vmem:[#allocation7 + $0x58] sm:$0xff]
    %v88 = vld [vmem:[#allocation7 + $0x60] sm:$0xff]
    %v89 = vld [vmem:[#allocation7 + $0x68] sm:$0xff]
    %v90 = vld [vmem:[#allocation7 + $0x70] sm:$0xff]
    %v91 = vld [vmem:[#allocation7 + $0x78] sm:$0xff]
    %v92 = vld [vmem:[#allocation7 + $0x80] sm:$0xff]
    %v93 = vld [vmem:[#allocation7 + $0x88] sm:$0xff]
    %v94 = vld [vmem:[#allocation7 + $0x90] sm:$0xff]
    %v95 = vld [vmem:[#allocation7 + $0x98] sm:$0xff]
    %v96 = vld [vmem:[#allocation7 + $0xa0] sm:$0xff]
    %v97 = vld [vmem:[#allocation7 + $0xa8] sm:$0xff]
    %v98 = vld [vmem:[#allocation7 + $0xb0] sm:$0xff]
    %v99 = vld [vmem:[#allocation7 + $0xb8] sm:$0xff]
    %v100 = vld [vmem:[#allocation7 + $0xc0] sm:$0xff]
    %v101 = vld [vmem:[#allocation7 + $0xc8] sm:$0xff]
    %v102 = vld [vmem:[#allocation7 + $0xd0] sm:$0xff]
    %v103 = vld [vmem:[#allocation7 + $0xd8] sm:$0xff]
    %v104 = vld [vmem:[#allocation7 + $0xe0] sm:$0xff]
    %v105 = vld [vmem:[#allocation7 + $0xe8] sm:$0xff]
    %v106 = vld [vmem:[#allocation7 + $0xf0] sm:$0xff]
    %v107 = vld [vmem:[#allocation7 + $0xf8] sm:$0xff]
    %v108 = vld [vmem:[%s3] sm:$0x3]
    %v110 = vlaneseq
    %v111 = vshrl.u32 %v110, 7
    %v112 = vsub.s32 0, %v111
    %v113 = vrot.slane %v108, %v112
    %v114 = vlaneseq
    %v115 = vshrl.u32 %v114, 7
    %v116 = vsub.s32 1, %v115
    %v117 = vrot.slane %v108, %v116
    %120 = vmatprep.subr.mxu0 %v77
    %121 = vmatpush1.msra.mxu0 %v76
    %122 = vmatprep.subr.mxu0 %v79
    %123 = vmatpush1.msra.mxu0 %v78
    %124 = vmatprep.subr.mxu0 %v81
    %125 = vmatpush1.msra.mxu0 %v80
    %126 = vmatprep.subr.mxu0 %v83
    %127 = vmatpush1.msra.mxu0 %v82
    %128 = vmatprep.subr.mxu0 %v85
    %129 = vmatpush1.msra.mxu0 %v84
    %130 = vmatprep.subr.mxu0 %v87
    %131 = vmatpush1.msra.mxu0 %v86
    %132 = vmatprep.subr.mxu0 %v89
    %133 = vmatpush1.msra.mxu0 %v88
    %134 = vmatprep.subr.mxu0 %v91
    %135 = vmatpush1.msra.mxu0 %v90
    %136 = vmatprep.subr.mxu0 %v93
    %137 = vmatpush1.msra.mxu0 %v92
    %138 = vmatprep.subr.mxu0 %v95
    %139 = vmatpush1.msra.mxu0 %v94
    %140 = vmatprep.subr.mxu0 %v97
    %141 = vmatpush1.msra.mxu0 %v96
    %142 = vmatprep.subr.mxu0 %v99
    %143 = vmatpush1.msra.mxu0 %v98
    %144 = vmatprep.subr.mxu0 %v101
    %145 = vmatpush1.msra.mxu0 %v100
    %146 = vmatprep.subr.mxu0 %v103
    %147 = vmatpush1.msra.mxu0 %v102
    %148 = vmatprep.subr.mxu0 %v105
    %149 = vmatpush1.msra.mxu0 %v104
    %150 = vmatprep.subr.mxu0 %v107
    %151 = vmatpush1.msra.mxu0 %v106
    %152 = vmatprep.subr.mxu0 0.0
    %153 = vmatpush1.msra.mxu0 0.0
    %154 = vmatprep.subr.mxu0 0.0
    %155 = vmatpush1.msra.mxu0 0.0
    %156 = vmatprep.subr.mxu0 0.0
    %157 = vmatpush1.msra.mxu0 0.0
    %158 = vmatprep.subr.mxu0 0.0
    %159 = vmatpush1.msra.mxu0 0.0
    %160 = vmatprep.subr.mxu0 0.0
    %161 = vmatpush1.msra.mxu0 0.0
    %162 = vmatprep.subr.mxu0 0.0
    %163 = vmatpush1.msra.mxu0 0.0
    %164 = vmatprep.subr.mxu0 0.0
    %165 = vmatpush1.msra.mxu0 0.0
    %166 = vmatprep.subr.mxu0 0.0
    %167 = vmatpush1.msra.mxu0 0.0
    %168 = vmatprep.subr.mxu0 0.0
    %169 = vmatpush1.msra.mxu0 0.0
    %170 = vmatprep.subr.mxu0 0.0
    %171 = vmatpush1.msra.mxu0 0.0
    %172 = vmatprep.subr.mxu0 0.0
    %173 = vmatpush1.msra.mxu0 0.0
    %174 = vmatprep.subr.mxu0 0.0
    %175 = vmatpush1.msra.mxu0 0.0
    %176 = vmatprep.subr.mxu0 0.0
    %177 = vmatpush1.msra.mxu0 0.0
    %178 = vmatprep.subr.mxu0 0.0
    %179 = vmatpush1.msra.mxu0 0.0
    %180 = vmatprep.subr.mxu0 0.0
    %181 = vmatpush1.msra.mxu0 0.0
    %182 = vmatprep.subr.mxu0 0.0
    %183 = vmatpush1.msra.mxu0 0.0
    %184 = vmatprep.mubr.f32.mxu0 0.0
    %185 = vmatmul.mubr.f32.gmra.mrb[0].mxu0 %v75
    %v186 = vpop.f32.mrb[0].mxu0
    %v187 = vadd.f32 %v113, %v186
    %v188 = vpop.f32.mrb[0].mxu0
    %v189 = vadd.f32 %v117, %v188
    %190 = vdwg.mxu0
    %v191 = vld [vmem:[#allocation5] sm:$0xff]
    %v192 = vmul.f32 %v187, %v191
    %v193 = vadd.f32 %v192, %v189
    %v194 = vld [vmem:[#allocation8] sm:$0xff]
    %v195 = vld [vmem:[#allocation8 + $0x8] sm:$0xff]
    %v196 = vld [vmem:[#allocation8 + $0x10] sm:$0xff]
    %v197 = vld [vmem:[#allocation8 + $0x18] sm:$0xff]
    %v198 = vld [vmem:[#allocation8 + $0x20] sm:$0xff]
    %v199 = vld [vmem:[#allocation8 + $0x28] sm:$0xff]
    %v200 = vld [vmem:[#allocation8 + $0x30] sm:$0xff]
    %v201 = vld [vmem:[#allocation8 + $0x38] sm:$0xff]
    %v202 = vld [vmem:[#allocation8 + $0x40] sm:$0xff]
    %v203 = vld [vmem:[#allocation8 + $0x48] sm:$0xff]
    %v204 = vld [vmem:[#allocation8 + $0x50] sm:$0xff]
    %v205 = vld [vmem:[#allocation8 + $0x58] sm:$0xff]
    %v206 = vld [vmem:[#allocation8 + $0x60] sm:$0xff]
    %v207 = vld [vmem:[#allocation8 + $0x68] sm:$0xff]
    %v208 = vld [vmem:[#allocation8 + $0x70] sm:$0xff]
    %v209 = vld [vmem:[#allocation8 + $0x78] sm:$0xff]
    %v210 = vld [vmem:[%s5] sm:$0x1]
    %v212 = vlaneseq
    %v213 = vshrl.u32 %v212, 7
    %v214 = vsub.s32 0, %v213
    %v215 = vrot.slane %v210, %v214
    %217 = vmatprep.subr.mxu0 0.0
    %218 = vmatpush1.msra.mxu0 %v194
    %219 = vmatprep.subr.mxu0 0.0
    %220 = vmatpush1.msra.mxu0 %v195
    %221 = vmatprep.subr.mxu0 0.0
    %222 = vmatpush1.msra.mxu0 %v196
    %223 = vmatprep.subr.mxu0 0.0
    %224 = vmatpush1.msra.mxu0 %v197
    %225 = vmatprep.subr.mxu0 0.0
    %226 = vmatpush1.msra.mxu0 %v198
    %227 = vmatprep.subr.mxu0 0.0
    %228 = vmatpush1.msra.mxu0 %v199
    %229 = vmatprep.subr.mxu0 0.0
    %230 = vmatpush1.msra.mxu0 %v200
    %231 = vmatprep.subr.mxu0 0.0
    %232 = vmatpush1.msra.mxu0 %v201
    %233 = vmatprep.subr.mxu0 0.0
    %234 = vmatpush1.msra.mxu0 %v202
    %235 = vmatprep.subr.mxu0 0.0
    %236 = vmatpush1.msra.mxu0 %v203
    %237 = vmatprep.subr.mxu0 0.0
    %238 = vmatpush1.msra.mxu0 %v204
    %239 = vmatprep.subr.mxu0 0.0
    %240 = vmatpush1.msra.mxu0 %v205
    %241 = vmatprep.subr.mxu0 0.0
    %242 = vmatpush1.msra.mxu0 %v206
    %243 = vmatprep.subr.mxu0 0.0
    %244 = vmatpush1.msra.mxu0 %v207
    %245 = vmatprep.subr.mxu0 0.0
    %246 = vmatpush1.msra.mxu0 %v208
    %247 = vmatprep.subr.mxu0 0.0
    %248 = vmatpush1.msra.mxu0 %v209
    %249 = vmatprep.subr.mxu0 0.0
    %250 = vmatpush1.msra.mxu0 0.0
    %251 = vmatprep.subr.mxu0 0.0
    %252 = vmatpush1.msra.mxu0 0.0
    %253 = vmatprep.subr.mxu0 0.0
    %254 = vmatpush1.msra.mxu0 0.0
    %255 = vmatprep.subr.mxu0 0.0
    %256 = vmatpush1.msra.mxu0 0.0
    %257 = vmatprep.subr.mxu0 0.0
    %258 = vmatpush1.msra.mxu0 0.0
    %259 = vmatprep.subr.mxu0 0.0
    %260 = vmatpush1.msra.mxu0 0.0
    %261 = vmatprep.subr.mxu0 0.0
    %262 = vmatpush1.msra.mxu0 0.0
    %263 = vmatprep.subr.mxu0 0.0
    %264 = vmatpush1.msra.mxu0 0.0
    %265 = vmatprep.subr.mxu0 0.0
    %266 = vmatpush1.msra.mxu0 0.0
    %267 = vmatprep.subr.mxu0 0.0
    %268 = vmatpush1.msra.mxu0 0.0
    %269 = vmatprep.subr.mxu0 0.0
    %270 = vmatpush1.msra.mxu0 0.0
    %271 = vmatprep.subr.mxu0 0.0
    %272 = vmatpush1.msra.mxu0 0.0
    %273 = vmatprep.subr.mxu0 0.0
    %274 = vmatpush1.msra.mxu0 0.0
    %275 = vmatprep.subr.mxu0 0.0
    %276 = vmatpush1.msra.mxu0 0.0
    %277 = vmatprep.subr.mxu0 0.0
    %278 = vmatpush1.msra.mxu0 0.0
    %279 = vmatprep.subr.mxu0 0.0
    %280 = vmatpush1.msra.mxu0 0.0
    %281 = vmatprep.mubr.f32.mxu0 0.0
    %282 = vmatmul.mubr.f32.gmra.mrb[0].mxu0 %v193
    %v283 = vpop.f32.mrb[0].mxu0
    %v284 = vadd.f32 %v215, %v283
    %v285 = vpop.f32.mrb[0].mxu0
    %286 = vdwg.mxu0
    %287 = vst [vmem:[#allocation10] sm:$0xff] %v284
    // Predicated region
    $region42: #{tpu_custom_call.1} parent=1 // pred_check
      _
    $region43: #{tpu_custom_call.1} parent=1 // pred_check_branch
      %289 = sbr.rel (0) target = $region45
    $region44: #{tpu_custom_call.1} parent=1 // pred_region
      %s291 = ssub.s32 128, 128
      %292 = vsyncadd [#allocation4], %s291
      %s294 = sshll.u32 [#allocation10], 4
      %s295 = int_to_ptr.vmem [resolvable:$true] %s294
      %297 = dma.vmem_to_hbm [thread:$0]  %s295, 128, %s6, [#allocation4]
    $region45: #{tpu_custom_call.1} parent=1 // pred_fallthru
      _
    // Predicated region
    $region46: #{tpu_custom_call.1} parent=1 // pred_check
      _
    $region47: #{tpu_custom_call.1} parent=1 // pred_check_branch
      %299 = sbr.rel (0) target = $region49
    $region48: #{tpu_custom_call.1} parent=1 // pred_region
      %300 = dma.done [#allocation4], 128
    $region49: #{tpu_custom_call.1} parent=1 // pred_fallthru
      _
    %301 = vsyncpa [#allocation3], 1
    %302 = vsyncpa [#allocation6], 1
    %303 = vsyncpa [#allocation9], 1
    %304 = vsyncpa [#allocation4], 1

</llo_original>
